<compile_context>
chip_gen: v7x
topology: tpu7x:2x2x1
jax: 0.10.0
libtpu: 0.0.40
codegen_flags: <defaults>
</compile_context>

<pallas_src>
import jax
import jax.numpy as jnp
from jax.experimental import pallas as pl
from jax.experimental.pallas import tpu as pltpu

BN_EPS = 1e-5


def frelu_kernel(w_ref, scale_ref, shift_ref, x_ref, o_ref, pad_ref):
    # w_ref:     SMEM (C*9,)   depthwise 3x3 weights, flat index c*9 + di*3 + dj
    # scale_ref: SMEM (C,)     gamma / sqrt(var + eps)
    # shift_ref: SMEM (C,)     beta - mean * scale
    # x_ref:     VMEM (H, W)   input plane for (batch n, channel c)
    # o_ref:     VMEM (H, W)   output plane
    # pad_ref:   VMEM (H+2, W+2) f32 scratch: zero-padded input tile
    H, W = x_ref.shape
    c = pl.program_id(1)

    # Build the zero-padded tile (padding=1 halo) in VMEM scratch.
    pad_ref[...] = jnp.zeros((H + 2, W + 2), jnp.float32)
    pad_ref[1:H + 1, 1:W + 1] = x_ref[...].astype(jnp.float32)

    # Depthwise 3x3 conv = 9 shifted slices of the padded scratch (VPU MACs),
    # with per-channel scalar weights read from SMEM.
    acc = pad_ref[0:H, 0:W] * w_ref[c * 9]
    for t in range(1, 9):
        di, dj = t // 3, t % 3
        acc = acc + pad_ref[di:di + H, dj:dj + W] * w_ref[c * 9 + t]

    # Fused inference BatchNorm + FReLU max (compare against the f32 copy of x
    # already sitting in the scratch interior).
    bn = acc * scale_ref[c] + shift_ref[c]
    o_ref[...] = jnp.maximum(pad_ref[1:H + 1, 1:W + 1], bn).astype(o_ref.dtype)


def frelu_pallas(x_nchw, w_oihw, gamma, beta, running_mean, running_var):
    """x_nchw: (N, C, H, W); w_oihw: (C, 1, 3, 3) depthwise conv weights."""
    N, C, H, W = x_nchw.shape

    # Fold eval-mode BatchNorm into per-channel scale / shift (done once in
    # the wrapper, not per grid step).
    scale = (gamma.astype(jnp.float32)
             * jax.lax.rsqrt(running_var.astype(jnp.float32) + BN_EPS))
    shift = beta.astype(jnp.float32) - running_mean.astype(jnp.float32) * scale
    w_flat = w_oihw.astype(jnp.float32).reshape(C * 9)   # [c*9 + di*3 + dj]

    itemsize = jnp.dtype(x_nchw.dtype).itemsize
    return pl.pallas_call(
        frelu_kernel,
        out_shape=jax.ShapeDtypeStruct((N, C, H, W), x_nchw.dtype),
        grid_spec=pltpu.PrefetchScalarGridSpec(
            num_scalar_prefetch=3,            # w_flat, scale, shift -> SMEM
            grid=(N, C),
            in_specs=[
                pl.BlockSpec((None, None, H, W),
                             lambda n, c, w, s, b: (n, c, 0, 0)),
            ],
            out_specs=pl.BlockSpec((None, None, H, W),
                                   lambda n, c, w, s, b: (n, c, 0, 0)),
            scratch_shapes=[pltpu.VMEM((H + 2, W + 2), jnp.float32)],
        ),
        compiler_params=pltpu.CompilerParams(
            dimension_semantics=("parallel", "parallel")),
        cost_estimate=pl.CostEstimate(
            flops=21 * N * C * H * W,              # 9 MACs + BN + max per elem
            transcendentals=0,
            bytes_accessed=2 * N * C * H * W * itemsize),
    )(w_flat, scale, shift, x_nchw)


def frelu_reference(x, w_oihw, gamma, beta, running_mean, running_var):
    """Pure-JAX reference mirroring the PyTorch forward (eval-mode BN)."""
    C = x.shape[1]
    y = jax.lax.conv_general_dilated(
        x, w_oihw, window_strides=(1, 1), padding=((1, 1), (1, 1)),
        feature_group_count=C, dimension_numbers=('NCHW', 'OIHW', 'NCHW'))
    scale = gamma / jnp.sqrt(running_var + BN_EPS)
    shift = beta - running_mean * scale
    bn = y * scale[None, :, None, None] + shift[None, :, None, None]
    return jnp.maximum(x, bn)


if __name__ == "__main__":
    key = jax.random.PRNGKey(0)
    k_x, k_w, k_g, k_b, k_m, k_v = jax.random.split(key, 6)

    N, C, H, W = 2, 4, 16, 16
    x = jax.random.normal(k_x, (N, C, H, W), dtype=jnp.float32)

    # Deterministic parameter init (synthetic; shapes match nn.Conv2d(c1, c1, 3,
    # groups=c1, bias=False) and nn.BatchNorm2d(c1)).
    w_oihw = jax.random.normal(k_w, (C, 1, 3, 3), dtype=jnp.float32) * 0.2
    gamma = 1.0 + 0.1 * jax.random.normal(k_g, (C,), dtype=jnp.float32)
    beta = 0.1 * jax.random.normal(k_b, (C,), dtype=jnp.float32)
    running_mean = 0.1 * jax.random.normal(k_m, (C,), dtype=jnp.float32)
    running_var = jax.random.uniform(k_v, (C,), dtype=jnp.float32,
                                     minval=0.5, maxval=1.5)

    out = jax.block_until_ready(
        frelu_pallas(x, w_oihw, gamma, beta, running_mean, running_var))
    ref = jax.block_until_ready(
        frelu_reference(x, w_oihw, gamma, beta, running_mean, running_var))

    assert out.shape == (N, C, H, W)
    assert jnp.allclose(out, ref, atol=1e-5, rtol=1e-5), \
        f"max abs err = {jnp.max(jnp.abs(out - ref))}"
    print("KERNEL_OK")
</pallas_src>

<mosaic_0001>
module attributes {stable_mosaic.version = 11 : i64} {
  func.func @frelu_kernel(%arg0: i32, %arg1: i32, %arg2: memref<36xf32, #tpu.memory_space<smem>>, %arg3: memref<4xf32, #tpu.memory_space<smem>>, %arg4: memref<4xf32, #tpu.memory_space<smem>>, %arg5: memref<1x1x16x16xf32, #tpu.memory_space<vmem>>, %arg6: memref<1x1x16x16xf32, #tpu.memory_space<vmem>>, %arg7: memref<18x18xf32, #tpu.memory_space<vmem>>) attributes {dimension_semantics = [#tpu.dimension_semantics<parallel>, #tpu.dimension_semantics<parallel>], iteration_bounds = array<i64: 2, 4>, scalar_prefetch = 3 : i64, scratch_operands = 1 : i64, tpu.core_type = #tpu.core_type<tc>, window_params = [{transform_indices = @transform_0, window_bounds = array<i64: 1, 1, 16, 16>}, {transform_indices = @transform_1, window_bounds = array<i64: 1, 1, 16, 16>}]} {
    %cst = arith.constant 0.000000e+00 : f32
    %0 = vector.broadcast %cst : f32 to vector<18x18xf32>
    %c0 = arith.constant 0 : index
    %c0_0 = arith.constant 0 : index
    %1 = vector.load %arg7[%c0, %c0_0] : memref<18x18xf32, #tpu.memory_space<vmem>>, vector<18x18xf32>
    tpu.vector_store %arg7[%c0, %c0_0], %0 {strides = array<i32>} : memref<18x18xf32, #tpu.memory_space<vmem>>, vector<18x18xf32>,
    %c0_1 = arith.constant 0 : index
    %c0_2 = arith.constant 0 : index
    %c0_3 = arith.constant 0 : index
    %c0_4 = arith.constant 0 : index
    %2 = vector.load %arg5[%c0_1, %c0_2, %c0_3, %c0_4] : memref<1x1x16x16xf32, #tpu.memory_space<vmem>>, vector<1x1x16x16xf32>
    %3 = vector.shape_cast %2 : vector<1x1x16x16xf32> to vector<16x16xf32>
    %c1 = arith.constant 1 : index
    %c1_5 = arith.constant 1 : index
    %4 = vector.load %arg7[%c1, %c1_5] : memref<18x18xf32, #tpu.memory_space<vmem>>, vector<16x16xf32>
    tpu.vector_store %arg7[%c1, %c1_5], %3 {strides = array<i32>} : memref<18x18xf32, #tpu.memory_space<vmem>>, vector<16x16xf32>,
    %c0_6 = arith.constant 0 : index
    %c0_7 = arith.constant 0 : index
    %5 = vector.load %arg7[%c0_6, %c0_7] : memref<18x18xf32, #tpu.memory_space<vmem>>, vector<16x16xf32>
    %c9_i32 = arith.constant 9 : i32
    %6 = arith.muli %arg1, %c9_i32 : i32
    %7 = arith.index_cast %6 : i32 to index
    %8 = memref.load %arg2[%7] : memref<36xf32, #tpu.memory_space<smem>>
    %9 = vector.broadcast %8 : f32 to vector<16x16xf32>
    %10 = arith.mulf %5, %9 : vector<16x16xf32>
    %c0_8 = arith.constant 0 : index
    %c1_9 = arith.constant 1 : index
    %11 = vector.load %arg7[%c0_8, %c1_9] : memref<18x18xf32, #tpu.memory_space<vmem>>, vector<16x16xf32>
    %c9_i32_10 = arith.constant 9 : i32
    %12 = arith.muli %arg1, %c9_i32_10 : i32
    %c1_i32 = arith.constant 1 : i32
    %13 = arith.addi %12, %c1_i32 : i32
    %14 = arith.index_cast %13 : i32 to index
    %15 = memref.load %arg2[%14] : memref<36xf32, #tpu.memory_space<smem>>
    %16 = vector.broadcast %15 : f32 to vector<16x16xf32>
    %17 = arith.mulf %11, %16 : vector<16x16xf32>
    %18 = arith.addf %10, %17 : vector<16x16xf32>
    %c0_11 = arith.constant 0 : index
    %c2 = arith.constant 2 : index
    %19 = vector.load %arg7[%c0_11, %c2] : memref<18x18xf32, #tpu.memory_space<vmem>>, vector<16x16xf32>
    %c9_i32_12 = arith.constant 9 : i32
    %20 = arith.muli %arg1, %c9_i32_12 : i32
    %c2_i32 = arith.constant 2 : i32
    %21 = arith.addi %20, %c2_i32 : i32
    %22 = arith.index_cast %21 : i32 to index
    %23 = memref.load %arg2[%22] : memref<36xf32, #tpu.memory_space<smem>>
    %24 = vector.broadcast %23 : f32 to vector<16x16xf32>
    %25 = arith.mulf %19, %24 : vector<16x16xf32>
    %26 = arith.addf %18, %25 : vector<16x16xf32>
    %c1_13 = arith.constant 1 : index
    %c0_14 = arith.constant 0 : index
    %27 = vector.load %arg7[%c1_13, %c0_14] : memref<18x18xf32, #tpu.memory_space<vmem>>, vector<16x16xf32>
    %c9_i32_15 = arith.constant 9 : i32
    %28 = arith.muli %arg1, %c9_i32_15 : i32
    %c3_i32 = arith.constant 3 : i32
    %29 = arith.addi %28, %c3_i32 : i32
    %30 = arith.index_cast %29 : i32 to index
    %31 = memref.load %arg2[%30] : memref<36xf32, #tpu.memory_space<smem>>
    %32 = vector.broadcast %31 : f32 to vector<16x16xf32>
    %33 = arith.mulf %27, %32 : vector<16x16xf32>
    %34 = arith.addf %26, %33 : vector<16x16xf32>
    %c1_16 = arith.constant 1 : index
    %c1_17 = arith.constant 1 : index
    %35 = vector.load %arg7[%c1_16, %c1_17] : memref<18x18xf32, #tpu.memory_space<vmem>>, vector<16x16xf32>
    %c9_i32_18 = arith.constant 9 : i32
    %36 = arith.muli %arg1, %c9_i32_18 : i32
    %c4_i32 = arith.constant 4 : i32
    %37 = arith.addi %36, %c4_i32 : i32
    %38 = arith.index_cast %37 : i32 to index
    %39 = memref.load %arg2[%38] : memref<36xf32, #tpu.memory_space<smem>>
    %40 = vector.broadcast %39 : f32 to vector<16x16xf32>
    %41 = arith.mulf %35, %40 : vector<16x16xf32>
    %42 = arith.addf %34, %41 : vector<16x16xf32>
    %c1_19 = arith.constant 1 : index
    %c2_20 = arith.constant 2 : index
    %43 = vector.load %arg7[%c1_19, %c2_20] : memref<18x18xf32, #tpu.memory_space<vmem>>, vector<16x16xf32>
    %c9_i32_21 = arith.constant 9 : i32
    %44 = arith.muli %arg1, %c9_i32_21 : i32
    %c5_i32 = arith.constant 5 : i32
    %45 = arith.addi %44, %c5_i32 : i32
    %46 = arith.index_cast %45 : i32 to index
    %47 = memref.load %arg2[%46] : memref<36xf32, #tpu.memory_space<smem>>
    %48 = vector.broadcast %47 : f32 to vector<16x16xf32>
    %49 = arith.mulf %43, %48 : vector<16x16xf32>
    %50 = arith.addf %42, %49 : vector<16x16xf32>
    %c2_22 = arith.constant 2 : index
    %c0_23 = arith.constant 0 : index
    %51 = vector.load %arg7[%c2_22, %c0_23] : memref<18x18xf32, #tpu.memory_space<vmem>>, vector<16x16xf32>
    %c9_i32_24 = arith.constant 9 : i32
    %52 = arith.muli %arg1, %c9_i32_24 : i32
    %c6_i32 = arith.constant 6 : i32
    %53 = arith.addi %52, %c6_i32 : i32
    %54 = arith.index_cast %53 : i32 to index
    %55 = memref.load %arg2[%54] : memref<36xf32, #tpu.memory_space<smem>>
    %56 = vector.broadcast %55 : f32 to vector<16x16xf32>
    %57 = arith.mulf %51, %56 : vector<16x16xf32>
    %58 = arith.addf %50, %57 : vector<16x16xf32>
    %c2_25 = arith.constant 2 : index
    %c1_26 = arith.constant 1 : index
    %59 = vector.load %arg7[%c2_25, %c1_26] : memref<18x18xf32, #tpu.memory_space<vmem>>, vector<16x16xf32>
    %c9_i32_27 = arith.constant 9 : i32
    %60 = arith.muli %arg1, %c9_i32_27 : i32
    %c7_i32 = arith.constant 7 : i32
    %61 = arith.addi %60, %c7_i32 : i32
    %62 = arith.index_cast %61 : i32 to index
    %63 = memref.load %arg2[%62] : memref<36xf32, #tpu.memory_space<smem>>
    %64 = vector.broadcast %63 : f32 to vector<16x16xf32>
    %65 = arith.mulf %59, %64 : vector<16x16xf32>
    %66 = arith.addf %58, %65 : vector<16x16xf32>
    %c2_28 = arith.constant 2 : index
    %c2_29 = arith.constant 2 : index
    %67 = vector.load %arg7[%c2_28, %c2_29] : memref<18x18xf32, #tpu.memory_space<vmem>>, vector<16x16xf32>
    %c9_i32_30 = arith.constant 9 : i32
    %68 = arith.muli %arg1, %c9_i32_30 : i32
    %c8_i32 = arith.constant 8 : i32
    %69 = arith.addi %68, %c8_i32 : i32
    %70 = arith.index_cast %69 : i32 to index
    %71 = memref.load %arg2[%70] : memref<36xf32, #tpu.memory_space<smem>>
    %72 = vector.broadcast %71 : f32 to vector<16x16xf32>
    %73 = arith.mulf %67, %72 : vector<16x16xf32>
    %74 = arith.addf %66, %73 : vector<16x16xf32>
    %75 = arith.index_cast %arg1 : i32 to index
    %76 = memref.load %arg3[%75] : memref<4xf32, #tpu.memory_space<smem>>
    %77 = vector.broadcast %76 : f32 to vector<16x16xf32>
    %78 = arith.mulf %74, %77 : vector<16x16xf32>
    %79 = arith.index_cast %arg1 : i32 to index
    %80 = memref.load %arg4[%79] : memref<4xf32, #tpu.memory_space<smem>>
    %81 = vector.broadcast %80 : f32 to vector<16x16xf32>
    %82 = arith.addf %78, %81 : vector<16x16xf32>
    %c1_31 = arith.constant 1 : index
    %c1_32 = arith.constant 1 : index
    %83 = vector.load %arg7[%c1_31, %c1_32] : memref<18x18xf32, #tpu.memory_space<vmem>>, vector<16x16xf32>
    %84 = arith.maximumf %83, %82 : vector<16x16xf32>
    %c0_33 = arith.constant 0 : index
    %c0_34 = arith.constant 0 : index
    %c0_35 = arith.constant 0 : index
    %c0_36 = arith.constant 0 : index
    %85 = vector.load %arg6[%c0_33, %c0_34, %c0_35, %c0_36] : memref<1x1x16x16xf32, #tpu.memory_space<vmem>>, vector<1x1x16x16xf32>
    %86 = vector.shape_cast %85 : vector<1x1x16x16xf32> to vector<16x16xf32>
    %87 = vector.shape_cast %84 : vector<16x16xf32> to vector<1x1x16x16xf32>
    tpu.vector_store %arg6[%c0_33, %c0_34, %c0_35, %c0_36], %87 {strides = array<i32>} : memref<1x1x16x16xf32, #tpu.memory_space<vmem>>, vector<1x1x16x16xf32>,
    return
  }
  func.func @transform_0(%arg0: i32, %arg1: i32, %arg2: memref<36xf32, #tpu.memory_space<smem>>, %arg3: memref<4xf32, #tpu.memory_space<smem>>, %arg4: memref<4xf32, #tpu.memory_space<smem>>) -> (i32, i32, i32, i32) {
    %c0_i32 = arith.constant 0 : i32
    %c0_i32_0 = arith.constant 0 : i32
    %c0_i32_1 = arith.constant 0 : i32
    return %arg0, %arg1, %c0_i32, %c0_i32_0 : i32, i32, i32, i32
  }
  func.func @transform_1(%arg0: i32, %arg1: i32, %arg2: memref<36xf32, #tpu.memory_space<smem>>, %arg3: memref<4xf32, #tpu.memory_space<smem>>, %arg4: memref<4xf32, #tpu.memory_space<smem>>) -> (i32, i32, i32, i32) {
    %c0_i32 = arith.constant 0 : i32
    %c0_i32_0 = arith.constant 0 : i32
    %c0_i32_1 = arith.constant 0 : i32
    return %arg0, %arg1, %c0_i32, %c0_i32_0 : i32, i32, i32, i32
  }
}

</mosaic_0001>

<llo_original>
// kernel: tpu_custom_call.1
$region0: #{tpu_custom_call.1}
  #allocation0 [shape = 'u32[]', space=smem, size = 0x4, offset = 0x4, fixed_abs, tag = 'smem constant byte address 0x4 - core index']
  #allocation1 [shape = 'u32[144,128]{1,0:T(1,128)}', space=vmem, size = 0x12000, scoped, tag = 'internal scratch']
  #allocation2 [shape = 'f32[18,18]{1,0:T(8,128)}', space=vmem, size = 0x3000, scoped, tag = 'scratch operand']
  #allocation3 [shape = 's32[1]{0}', space=sflag, size = 0x4, scoped, tag = 'scoped memory for tpu_custom_call.1']
  #allocation4 [shape = 'u8[512]{0}', space=smem, size = 0x200, scoped, tag = 'prefetched SMEM operand 0']
  #allocation5 [shape = 'u8[512]{0}', space=smem, size = 0x200, scoped, tag = 'prefetched SMEM operand 1']
  #allocation6 [shape = 'u8[512]{0}', space=smem, size = 0x200, scoped, tag = 'prefetched SMEM operand 2']
  %s0 = inlined_call_operand.hbm [shape: f32[36], index: 0, kind: input, shape index: {}]
  %s1 = inlined_call_operand.vmem [shape: f32[4], index: 1, kind: input, shape index: {}]
  %s2 = inlined_call_operand.vmem [shape: f32[4], index: 2, kind: input, shape index: {}]
  %s3 = inlined_call_operand.hbm [shape: f32[2,4,16,16], index: 3, kind: input, shape index: {}]
  %s4 = inlined_call_operand.hbm [shape: f32[2,4,16,16], index: 4, kind: output, shape index: {}]
  %s5 = sld [smem:[#allocation0]]
  $region41: #{tpu_custom_call.1} parent=0
    _
  %s7 = ssub.s32 1, %s5
  %s8 = scalar_select 0, %s7, %s5
  %10 = dma.hbm_to_smem %s0, 16, [#allocation4], [#allocation3]
  %s11 = sshll.u32 %s1, 4
  %s12 = int_to_ptr.vmem [resolvable:$true] %s11
  %14 = dma.vmem_to_smem %s12, 16, [#allocation5], [#allocation3]
  %s15 = sshll.u32 %s2, 4
  %s16 = int_to_ptr.vmem [resolvable:$true] %s15
  %18 = dma.vmem_to_smem %s16, 16, [#allocation6], [#allocation3]
  %19 = dma.done [#allocation3], 48
  %20 = sfence
  $region1: #{tpu_custom_call.1} parent=0
    #allocation7 [shape = 'u8[16384]{0}', space=vmem, size = 0x4000, scoped, tag = 'input window, operand 3']
    #allocation8 [shape = 's32[2]{0}', space=sflag, size = 0x8, scoped, tag = 'scoped memory for tpu_custom_call.1']
    #allocation9 [shape = 's32[2]{0}', space=sflag, size = 0x8, scoped, tag = 'scoped memory for tpu_custom_call.1']
    #allocation10 [shape = 'u8[16384]{0}', space=vmem, size = 0x4000, scoped, tag = 'output window, operand 0']
    %21 = vsyncpa [#allocation8], 0
    %s22 = scalar_lea.sflag [#allocation8], 1
    %23 = vsyncpa %s22, 0
    %24 = vsyncpa [#allocation9], 0
    %s25 = scalar_lea.sflag [#allocation9], 1
    %26 = vsyncpa %s25, 0
    loop: start=0, step=1, limit=10
    $region2: #{tpu_custom_call.1} parent=1 // loop_pre_header
      _
    $region3: #{tpu_custom_call.1} parent=1 // loop_header
      %s28 = sphi 0, %s32
      %p29 = scmp.ge.s32.totalorder %s28, 10
      %s35 = sphi 0, %s47
      %s36 = sphi 0, %s43
      %s37 = sphi 0, %s35
      %s38 = sphi 0, %s36
      %s39 = sphi 0, %s37
      %s40 = sphi 0, %s38
      %s52 = sphi 0, %s54
      %s55 = sphi 0, %s52
      %s56 = sphi 0, %s55
      %s72 = sphi 0, %s56
      %s80 = sphi 0, %s82
      %s83 = sphi 0, %s80
      %s84 = sphi 0, %s83
      %s100 = sphi 0, %s84
    $region4: #{tpu_custom_call.1} parent=1 // loop_header_branch
      %31 = sbr.rel (%p29) target = $region8
    $region5: #{tpu_custom_call.1} parent=1 // loop_body
      %s33 = ssub.s32 %s28, 1
      %s34 = ssub.s32 %s28, 2
      %s41 = sadd.s32 1, %s36
      %p42 = scmp.ge.s32.totalorder %s41, 4
      %s43 = scalar_select %p42, 0, %s41
      %s44 = sadd.s32 1, %s35
      %s45 = scalar_select %p42, %s44, %s35
      %p46 = scmp.ge.s32.totalorder %s45, 2
      %s47 = scalar_select %p46, 0, %s45
      %s48 = ssub.s32 %s35, %s47
      %s49 = ssub.s32 %s36, %s43
      %s50 = sor.u32 %s48, %s49
      %p51 = scmp.eq.s32.totalorder %s50, 0
      %s53 = sadd.s32 %s52, 1
      %s54 = scalar_select %p51, %s52, %s53
      %p57 = pneg %p51
      %p58 = scmp.eq.s32.totalorder %s28, 7
      %p59 = por %p57, %p58
      %p60 = scmp.ne.s32.totalorder %s52, %s55
      %p61 = scmp.eq.s32.totalorder %s28, 0
      %p62 = por %p60, %p61
      %p63 = scmp.ne.s32.totalorder %s52, %s55
      %p64 = scmp.eq.s32.totalorder %s33, 7
      %p65 = por %p63, %p64
      %p66 = scmp.ne.s32.totalorder %s55, %s56
      %p67 = scmp.eq.s32.totalorder %s33, 0
      %p68 = por %p66, %p67
      %p69 = scmp.ne.s32.totalorder %s55, %s56
      %p70 = scmp.eq.s32.totalorder %s34, 7
      %p71 = por %p69, %p70
      %p73 = scmp.ne.s32.totalorder %s56, %s72
      %p74 = scmp.eq.s32.totalorder %s34, 0
      %p75 = por %p73, %p74
      %s76 = ssub.s32 %s35, %s47
      %s77 = ssub.s32 %s36, %s43
      %s78 = sor.u32 %s76, %s77
      %p79 = scmp.eq.s32.totalorder %s78, 0
      %s81 = sadd.s32 %s80, 1
      %s82 = scalar_select %p79, %s80, %s81
      %p85 = pneg %p79
      %p86 = scmp.eq.s32.totalorder %s28, 7
      %p87 = por %p85, %p86
      %p88 = scmp.ne.s32.totalorder %s80, %s83
      %p89 = scmp.eq.s32.totalorder %s28, 0
      %p90 = por %p88, %p89
      %p91 = scmp.ne.s32.totalorder %s80, %s83
      %p92 = scmp.eq.s32.totalorder %s33, 7
      %p93 = por %p91, %p92
      %p94 = scmp.ne.s32.totalorder %s83, %s84
      %p95 = scmp.eq.s32.totalorder %s33, 0
      %p96 = por %p94, %p95
      %p97 = scmp.ne.s32.totalorder %s83, %s84
      %p98 = scmp.eq.s32.totalorder %s34, 7
      %p99 = por %p97, %p98
      %p101 = scmp.ne.s32.totalorder %s84, %s100
      %p102 = scmp.eq.s32.totalorder %s34, 0
      %p103 = por %p101, %p102
      %p104 = scmp.le.s32.totalorder 1, %s28
      %p105 = scmp.lt.s32.totalorder %s28, 9
      %p106 = pnand %p104, %p105
      %p107 = pneg %p106
      // Predicated region
      $region9: #{tpu_custom_call.1} parent=5 // pred_check
        _
      $region10: #{tpu_custom_call.1} parent=5 // pred_check_branch
        %109 = sbr.rel (%p106) target = $region12
      $region11: #{tpu_custom_call.1} parent=5 // pred_region
        %s110 = ssub.s32 %s28, 1
      $region12: #{tpu_custom_call.1} parent=5 // pred_fallthru
        _
      %p111 = scmp.lt.s32.totalorder %s28, 8
      // Predicated region
      $region13: #{tpu_custom_call.1} parent=5 // pred_check
        %p112 = pneg %p111
      $region14: #{tpu_custom_call.1} parent=5 // pred_check_branch
        %114 = sbr.rel (%p112) target = $region16
      $region15: #{tpu_custom_call.1} parent=5 // pred_region
        // Predicated region
        $region17: #{tpu_custom_call.1} parent=15 // pred_check
          %p115 = pneg %p62
        $region18: #{tpu_custom_call.1} parent=15 // pred_check_branch
          %117 = sbr.rel (%p115) target = $region20
        $region19: #{tpu_custom_call.1} parent=15 // pred_region
          %s118 = sand.u32 %s52, 1
          %s119 = scalar_lea.sflag [#allocation8], %s118
          %s120 = sand.u32 %s52, 1
          %s121 = smul.addr %s120, 16
          %s122 = scalar_lea.vmem [#allocation7], %s121
          %s124 = ssub.s32 256, 256
          %125 = vsyncadd %s119, %s124
          %s126 = smul.addr %s36, 2
          %s127 = smul.addr %s35, 8
          %s128 = sadd.s32 %s126, %s127
          %s129 = smul.addr %s128, 128
          %s130 = scalar_lea.hbm %s3, %s129
          %s131 = sshll.u32 %s122, 4
          %s132 = int_to_ptr.vmem [resolvable:$true] %s131
          %137 = dma.hbm_to_vmem [thread:$0]  %s130, 256, %s132, %s119, 128, 128, 8
        $region20: #{tpu_custom_call.1} parent=15 // pred_fallthru
          _
      $region16: #{tpu_custom_call.1} parent=5 // pred_fallthru
        _
      %p138 = scmp.le.s32.totalorder 1, %s28
      %p139 = scmp.lt.s32.totalorder %s28, 9
      %p140 = pnand %p138, %p139
      %p141 = pneg %p140
      // Predicated region
      $region21: #{tpu_custom_call.1} parent=5 // pred_check
        _
      $region22: #{tpu_custom_call.1} parent=5 // pred_check_branch
        %143 = sbr.rel (%p140) target = $region24
      $region23: #{tpu_custom_call.1} parent=5 // pred_region
        %s144 = ssub.s32 %s28, 1
        %s145 = sand.u32 %s55, 1
        %s146 = scalar_lea.sflag [#allocation8], %s145
        %s147 = sand.u32 %s55, 1
        %s148 = smul.addr %s147, 16
        %s149 = scalar_lea.vmem [#allocation7], %s148
        // Predicated region
        $region25: #{tpu_custom_call.1} parent=23 // pred_check
          %p150 = pneg %p68
        $region26: #{tpu_custom_call.1} parent=23 // pred_check_branch
          %152 = sbr.rel (%p150) target = $region28
        $region27: #{tpu_custom_call.1} parent=23 // pred_region
          %153 = dma.done %s146, 256
        $region28: #{tpu_custom_call.1} parent=23 // pred_fallthru
          _
        %s154 = sand.u32 %s55, 1
        %s155 = scalar_lea.sflag [#allocation8], %s154
        %s156 = sand.u32 %s55, 1
        %s157 = smul.addr %s156, 16
        %s158 = scalar_lea.vmem [#allocation7], %s157
        %p159 = pneg %p68
        %p160 = pneg %p65
        %p161 = pneg %p96
        %p162 = pneg %p93
        %s163 = sand.u32 %s83, 1
        %s164 = scalar_lea.sflag [#allocation9], %s163
        %s165 = sand.u32 %s83, 1
        %s166 = smul.addr %s165, 16
        %s167 = scalar_lea.vmem [#allocation10], %s166
        %vm168 = vcmask 146432
        %169 = vst.msk [vmem:[#allocation2] sm:$0xff] %vm168, 0.0
        %170 = vst.msk [vmem:[#allocation2 + $0x8] sm:$0xff] %vm168, 0.0
        %vm171 = vcmask 140288
        %172 = vst.msk [vmem:[#allocation2 + $0x10] sm:$0x3] %vm171, 0.0
        %v173 = vld [vmem:[%s149] sm:$0xff]
        %v174 = vld [vmem:[%s149 + $0x8] sm:$0xff]
        %177 = vrot.lane.b32.xlu0 %v173, 1
        %v178 = vpop.permute.xlu0 %177
        %179 = vrot.lane.b32.xlu0 %v174, 1
        %v180 = vpop.permute.xlu0 %179
        %vm183 = vcmask 138248
        %184 = vst.msk [vmem:[#allocation2 + $0x1] sm:$0xff] %vm183, %v178
        %185 = vst.msk [vmem:[#allocation2 + $0x9] sm:$0xff] %vm183, %v180
        %v186 = vld [vmem:[#allocation2] sm:$0xff]
        %v187 = vld [vmem:[#allocation2 + $0x8] sm:$0xff]
        %s188 = smul.u32 %s38, 9
        %s189 = sld [smem:[#allocation4 + %s188]]
        %v190 = vstv %s189
        %v191 = vmul.f32 %v186, %v190
        %v192 = vmul.f32 %v187, %v190
        %s193 = sadd.s32 %s188, 1
        %s194 = sld [smem:[#allocation4 + %s193]]
        %v195 = vstv %s194
        %v196 = vmul.f32 %v186, %v195
        %v197 = vmul.f32 %v187, %v195
        %200 = vrot.lane.b32.xlu0 %v196, 127
        %v201 = vpop.permute.xlu0 %200
        %202 = vrot.lane.b32.xlu0 %v197, 127
        %v203 = vpop.permute.xlu0 %202
        %v206 = vadd.f32 %v191, %v201
        %v207 = vadd.f32 %v192, %v203
        %s208 = sadd.s32 %s188, 2
        %s209 = sld [smem:[#allocation4 + %s208]]
        %v210 = vstv %s209
        %v211 = vmul.f32 %v186, %v210
        %v212 = vmul.f32 %v187, %v210
        %215 = vrot.lane.b32.xlu0 %v211, 126
        %v216 = vpop.permute.xlu0 %215
        %217 = vrot.lane.b32.xlu0 %v212, 126
        %v218 = vpop.permute.xlu0 %217
        %v221 = vadd.f32 %v206, %v216
        %v222 = vadd.f32 %v207, %v218
        %v223 = vld [vmem:[#allocation2 + $0x1] sm:$0xff]
        %v224 = vld [vmem:[#allocation2 + $0x9] sm:$0xff]
        %s225 = sadd.s32 %s188, 3
        %s226 = sld [smem:[#allocation4 + %s225]]
        %v227 = vstv %s226
        %v228 = vmul.f32 %v223, %v227
        %v229 = vmul.f32 %v224, %v227
        %v230 = vadd.f32 %v221, %v228
        %v231 = vadd.f32 %v222, %v229
        %s232 = sadd.s32 %s188, 4
        %s233 = sld [smem:[#allocation4 + %s232]]
        %v234 = vstv %s233
        %v235 = vmul.f32 %v223, %v234
        %v236 = vmul.f32 %v224, %v234
        %239 = vrot.lane.b32.xlu0 %v235, 127
        %v240 = vpop.permute.xlu0 %239
        %241 = vrot.lane.b32.xlu0 %v236, 127
        %v242 = vpop.permute.xlu0 %241
        %v245 = vadd.f32 %v230, %v240
        %v246 = vadd.f32 %v231, %v242
        %s247 = sadd.s32 %s188, 5
        %s248 = sld [smem:[#allocation4 + %s247]]
        %v249 = vstv %s248
        %v250 = vmul.f32 %v223, %v249
        %v251 = vmul.f32 %v224, %v249
        %254 = vrot.lane.b32.xlu0 %v250, 126
        %v255 = vpop.permute.xlu0 %254
        %256 = vrot.lane.b32.xlu0 %v251, 126
        %v257 = vpop.permute.xlu0 %256
        %v260 = vadd.f32 %v245, %v255
        %v261 = vadd.f32 %v246, %v257
        %v262 = vld [vmem:[#allocation2 + $0x2] sm:$0xff]
        %v263 = vld [vmem:[#allocation2 + $0xa] sm:$0xff]
        %s264 = sadd.s32 %s188, 6
        %s265 = sld [smem:[#allocation4 + %s264]]
        %v266 = vstv %s265
        %v267 = vmul.f32 %v262, %v266
        %v268 = vmul.f32 %v263, %v266
        %v269 = vadd.f32 %v260, %v267
        %v270 = vadd.f32 %v261, %v268
        %s271 = sadd.s32 %s188, 7
        %s272 = sld [smem:[#allocation4 + %s271]]
        %v273 = vstv %s272
        %v274 = vmul.f32 %v262, %v273
        %v275 = vmul.f32 %v263, %v273
        %278 = vrot.lane.b32.xlu0 %v274, 127
        %v279 = vpop.permute.xlu0 %278
        %280 = vrot.lane.b32.xlu0 %v275, 127
        %v281 = vpop.permute.xlu0 %280
        %v284 = vadd.f32 %v269, %v279
        %v285 = vadd.f32 %v270, %v281
        %s286 = sadd.s32 %s188, 8
        %s287 = sld [smem:[#allocation4 + %s286]]
        %v288 = vstv %s287
        %v289 = vmul.f32 %v262, %v288
        %v290 = vmul.f32 %v263, %v288
        %293 = vrot.lane.b32.xlu0 %v289, 126
        %v294 = vpop.permute.xlu0 %293
        %295 = vrot.lane.b32.xlu0 %v290, 126
        %v296 = vpop.permute.xlu0 %295
        %v299 = vadd.f32 %v284, %v294
        %v300 = vadd.f32 %v285, %v296
        %s301 = sld [smem:[#allocation5 + %s38]]
        %v302 = vstv %s301
        %v303 = vmul.f32 %v299, %v302
        %v304 = vmul.f32 %v300, %v302
        %s305 = sld [smem:[#allocation6 + %s38]]
        %v306 = vstv %s305
        %v307 = vadd.f32 %v303, %v306
        %v308 = vadd.f32 %v304, %v306
        %311 = vrot.lane.b32.xlu0 %v307, 1
        %v312 = vpop.permute.xlu0 %311
        %313 = vrot.lane.b32.xlu0 %v308, 1
        %v314 = vpop.permute.xlu0 %313
        %v317 = vmax.f32 %v223, %v312
        %v318 = vmax.f32 %v224, %v314
        %321 = vrot.lane.b32.xlu0 %v317, 127
        %v322 = vpop.permute.xlu0 %321
        %323 = vrot.lane.b32.xlu0 %v318, 127
        %v324 = vpop.permute.xlu0 %323
        %vm327 = vcmask 130048
        %328 = vst.msk [vmem:[%s167] sm:$0xff] %vm327, %v322
        %329 = vst.msk [vmem:[%s167 + $0x8] sm:$0xff] %vm327, %v324
        %s330 = sand.u32 %s83, 1
        %s331 = scalar_lea.sflag [#allocation9], %s330
        %s332 = sand.u32 %s83, 1
        %s333 = smul.addr %s332, 16
        %s334 = scalar_lea.vmem [#allocation10], %s333
        // Predicated region
        $region29: #{tpu_custom_call.1} parent=23 // pred_check
          %p335 = pneg %p93
        $region30: #{tpu_custom_call.1} parent=23 // pred_check_branch
          %337 = sbr.rel (%p335) target = $region32
        $region31: #{tpu_custom_call.1} parent=23 // pred_region
          %s339 = ssub.s32 256, 256
          %340 = vsyncadd %s331, %s339
          %s341 = smul.addr %s38, 2
          %s342 = smul.addr %s37, 8
          %s343 = sadd.s32 %s341, %s342
          %s344 = smul.addr %s343, 128
          %s345 = scalar_lea.hbm %s4, %s344
          %s346 = sshll.u32 %s334, 4
          %s347 = int_to_ptr.vmem [resolvable:$true] %s346
          %352 = dma.vmem_to_hbm [thread:$0]  %s347, 256, %s345, %s331, 128, 128, 8
        $region32: #{tpu_custom_call.1} parent=23 // pred_fallthru
          _
      $region24: #{tpu_custom_call.1} parent=5 // pred_fallthru
        _
      %p353 = scmp.le.s32.totalorder 2, %s28
      // Predicated region
      $region33: #{tpu_custom_call.1} parent=5 // pred_check
        %p354 = pneg %p353
      $region34: #{tpu_custom_call.1} parent=5 // pred_check_branch
        %356 = sbr.rel (%p354) target = $region36
      $region35: #{tpu_custom_call.1} parent=5 // pred_region
        %s357 = ssub.s32 %s28, 2
        // Predicated region
        $region37: #{tpu_custom_call.1} parent=35 // pred_check
          %p358 = pneg %p99
        $region38: #{tpu_custom_call.1} parent=35 // pred_check_branch
          %360 = sbr.rel (%p358) target = $region40
        $region39: #{tpu_custom_call.1} parent=35 // pred_region
          %s361 = sand.u32 %s84, 1
          %s362 = scalar_lea.sflag [#allocation9], %s361
          %s363 = sand.u32 %s84, 1
          %s364 = smul.addr %s363, 16
          %s365 = scalar_lea.vmem [#allocation10], %s364
          %366 = dma.done %s362, 256
        $region40: #{tpu_custom_call.1} parent=35 // pred_fallthru
          _
      $region36: #{tpu_custom_call.1} parent=5 // pred_fallthru
        _
    $region6: #{tpu_custom_call.1} parent=1 // loop_footer
      %s32 = sadd.s32 1, %s28
    $region7: #{tpu_custom_call.1} parent=1 // loop_footer_branch
      %27 = sbr.rel target = $region3
    $region8: #{tpu_custom_call.1} parent=1 // loop_exit
      _
    %367 = vsyncpa [#allocation8], 1
    %s368 = scalar_lea.sflag [#allocation8], 1
    %369 = vsyncpa %s368, 1
    %370 = vsyncpa [#allocation9], 1
    %s371 = scalar_lea.sflag [#allocation9], 1
    %372 = vsyncpa %s371, 1

</llo_original>
